<compile_context>
chip_gen: v5e
topology: v5e:2x2
jax: 0.10.0
libtpu: 0.0.40
codegen_flags: <defaults>
</compile_context>

<pallas_src>
import functools

import numpy as np
import jax
import jax.numpy as jnp
from jax import lax
from jax.experimental import pallas as pl
from jax.experimental.pallas import tpu as pltpu

BN_EPS = 1e-5


def _round_up(x, m):
    return (x + m - 1) // m * m


def _bn_fold(gamma, beta, mean, var):
    scale = gamma / jnp.sqrt(var + BN_EPS)
    shift = beta - mean * scale
    return scale, shift


# ------------------------------ fused kernel --------------------------------

def _fused_stem_neck_kernel(p_ref, w_ref, shift_ref, a1_ref, c1_ref,
                            a2_ref, c2_ref, o_ref, acc_ref, *,
                            pooled_rows_per_block, gap_count):
    """conv(im2col matmul)+BN+ReLU+MaxPool(3,2,1)+GAP accumulate; neck at end."""
    rb = pl.program_id(1)
    last_rb = pl.num_programs(1) - 1

    @pl.when(rb == 0)
    def _init():
        acc_ref[...] = jnp.zeros_like(acc_ref)

    _, _, ow, _ = p_ref.shape            # block: (1, 3*tph, OW, Kp), bf16
    cp = w_ref.shape[1]

    w = w_ref[...]                        # (Kp, Cp) bf16, BN scale pre-folded
    shift = shift_ref[...]                # (1, Cp)  f32  folded BN shift
    col_iota = lax.broadcasted_iota(jnp.int32, (ow, cp), 0)
    even_cols = (col_iota % 2) == 0       # pooled columns sit at even conv cols

    gap_partial = jnp.zeros((1, cp), jnp.float32)
    for i in range(pooled_rows_per_block):
        # conv + folded-BN + ReLU for the 3 (clamped) conv rows of pooled row i,
        # reduced on the fly with the row-direction max of MaxPool2d(3,2,1).
        r = None
        for t in range(3):
            y = jnp.dot(p_ref[0, 3 * i + t], w,
                        preferred_element_type=jnp.float32)       # (OW, Cp) f32
            y = jnp.maximum(y + shift, 0.0)
            r = y if r is None else jnp.maximum(r, y)
        # column-direction 3-tap max; clamped edge fills are safe post-ReLU
        up = jnp.concatenate([r[:1], r[:-1]], axis=0)              # col w-1
        dn = jnp.concatenate([r[1:], r[-1:]], axis=0)              # col w+1
        z3 = jnp.maximum(jnp.maximum(up, r), dn)
        # pooled outputs live at even columns; sum them for the global avg pool
        gap_partial = gap_partial + jnp.sum(
            jnp.where(even_cols, z3, 0.0), axis=0, keepdims=True)

    acc_ref[...] += gap_partial

    @pl.when(rb == last_rb)
    def _finalize():
        z = acc_ref[...] * (1.0 / gap_count)                       # GAP  (1, Cp)
        h = jnp.dot(z, a1_ref[...],
                    preferred_element_type=jnp.float32) + c1_ref[...]
        h = jnp.maximum(h, 0.0)                                    # BN1d+Linear+ReLU (folded)
        emb = jnp.dot(h, a2_ref[...],
                      preferred_element_type=jnp.float32) + c2_ref[...]
        o_ref[0] = emb                                             # Linear+BN1d (folded)


# -------------------------------- wrapper ------------------------------------

def backbone_forward(x_nchw, params, *, block_pooled_rows=None):
    N, C_in, H, W = x_nchw.shape
    KH = KW = 7
    S, P = 2, 3
    OH = (H + 2 * P - KH) // S + 1
    OW = (W + 2 * P - KW) // S + 1
    POH = (OH + 2 - 3) // 2 + 1
    POW = (OW + 2 - 3) // 2 + 1

    C_out = params["w_conv"].shape[0]
    E = params["w1"].shape[0]
    K = KH * KW * C_in
    Kp = _round_up(K, 128)                 # 147 -> 256 (lane-aligned contraction)
    Cp = _round_up(C_out, 128)             # 64  -> 128 (lane-dense channels)
    Ep = _round_up(E, 128)                 # 32  -> 128 (lane-dense embedding)

    # ---- XLA-side layout glue: NCHW -> NHWC, pad, im2col ---------------------
    x = jnp.transpose(x_nchw, (0, 2, 3, 1))
    xp = jnp.pad(x, ((0, 0), (P, P), (P, P), (0, 0)))
    cols = []
    for kh in range(KH):
        for kw in range(KW):
            cols.append(xp[:, kh:kh + S * (OH - 1) + 1:S,
                              kw:kw + S * (OW - 1) + 1:S, :])
    patches = jnp.concatenate(cols, axis=-1)                      # (N, OH, OW, K)
    patches = jnp.pad(patches, ((0, 0), (0, 0), (0, 0), (0, Kp - K)))

    # group conv rows by pooled row (3 clamped taps each) so MaxPool windows
    # never straddle a grid block; clamped duplicates are max-safe.
    row_idx = np.clip(2 * np.arange(POH)[:, None] - 1 + np.arange(3)[None, :],
                      0, OH - 1).reshape(-1)                      # (3*POH,)
    patches = patches[:, row_idx]                                 # (N, 3*POH, OW, Kp)
    patches = patches.astype(jnp.bfloat16)                        # bf16 MXU operands

    # ---- fold BatchNorms / Linears into matmul weights at trace time ---------
    conv_scale, conv_shift = _bn_fold(*params["bn_stem"])
    w_mat = jnp.transpose(params["w_conv"], (2, 3, 1, 0)).reshape(K, C_out)
    w_mat = w_mat * conv_scale[None, :]
    w_mat = jnp.pad(w_mat, ((0, Kp - K), (0, Cp - C_out))).astype(jnp.bfloat16)
    shift = jnp.pad(conv_shift, (0, Cp - C_out)).reshape(1, Cp)

    s1, b1 = _bn_fold(*params["bn1"])
    s2, b2 = _bn_fold(*params["bn2"])
    s3, b3 = _bn_fold(*params["bn3"])
    w1 = params["w1"].T                                           # (F, E)
    w2 = params["w2"].T                                           # (E, E)
    a1 = s1[:, None] * w1                                         # BN1 folded into w1
    c1 = b1 @ w1
    a2 = (s2[:, None] * w2) * s3[None, :]                         # BN2/BN3 folded into w2
    c2 = (b2 @ w2) * s3 + b3
    a1 = jnp.pad(a1, ((0, Cp - C_out), (0, Ep - E)))
    c1 = jnp.pad(c1, (0, Ep - E)).reshape(1, Ep)
    a2 = jnp.pad(a2, ((0, Ep - E), (0, Ep - E)))
    c2 = jnp.pad(c2, (0, Ep - E)).reshape(1, Ep)

    # ---- pooled-row tile: bounded per-step VMEM, divisor of POH --------------
    if block_pooled_rows is None:
        block_pooled_rows = max(1, 1024 // (3 * OW))              # ~1024 conv rows / block
    tph = max(d for d in range(1, POH + 1)
              if POH % d == 0 and d <= block_pooled_rows)
    n_rb = POH // tph

    kernel = functools.partial(_fused_stem_neck_kernel,
                               pooled_rows_per_block=tph,
                               gap_count=float(POH * POW))

    out = pl.pallas_call(
        kernel,
        out_shape=jax.ShapeDtypeStruct((N, 1, Ep), jnp.float32),
        grid=(N, n_rb),
        in_specs=[
            pl.BlockSpec((1, 3 * tph, OW, Kp), lambda n, rb: (n, rb, 0, 0)),
            pl.BlockSpec((Kp, Cp), lambda n, rb: (0, 0)),
            pl.BlockSpec((1, Cp), lambda n, rb: (0, 0)),
            pl.BlockSpec((Cp, Ep), lambda n, rb: (0, 0)),
            pl.BlockSpec((1, Ep), lambda n, rb: (0, 0)),
            pl.BlockSpec((Ep, Ep), lambda n, rb: (0, 0)),
            pl.BlockSpec((1, Ep), lambda n, rb: (0, 0)),
        ],
        out_specs=pl.BlockSpec((1, 1, Ep), lambda n, rb: (n, 0, 0)),
        scratch_shapes=[pltpu.VMEM((1, Cp), jnp.float32)],
        compiler_params=pltpu.CompilerParams(
            dimension_semantics=("parallel", "arbitrary")),
    )(patches, w_mat, shift, a1, c1, a2, c2)

    return out[:, 0, :E]


# ----------------------------- parameter init -------------------------------

def init_params(key, embedding_size=32, stem_channels=64):
    F, E = stem_channels, embedding_size
    keys = jax.random.split(key, 7)

    def bn(k, n):
        k1, k2, k3, k4 = jax.random.split(k, 4)
        gamma = 1.0 + 0.1 * jax.random.normal(k1, (n,), jnp.float32)
        beta = 0.1 * jax.random.normal(k2, (n,), jnp.float32)
        mean = 0.1 * jax.random.normal(k3, (n,), jnp.float32)
        var = 0.5 + jnp.abs(jax.random.normal(k4, (n,), jnp.float32))
        return gamma, beta, mean, var

    return {
        "w_conv": 0.05 * jax.random.normal(keys[0], (F, 3, 7, 7), jnp.float32),
        "bn_stem": bn(keys[1], F),
        "bn1": bn(keys[2], F),
        "w1": (1.0 / jnp.sqrt(F)) * jax.random.normal(keys[3], (E, F), jnp.float32),
        "bn2": bn(keys[4], E),
        "w2": (1.0 / jnp.sqrt(E)) * jax.random.normal(keys[5], (E, E), jnp.float32),
        "bn3": bn(keys[6], E),
    }


# ------------------------- pure-JAX reference check --------------------------

def backbone_reference(x, params):
    y = lax.conv_general_dilated(x, params["w_conv"], window_strides=(2, 2),
                                 padding=((3, 3), (3, 3)),
                                 dimension_numbers=("NCHW", "OIHW", "NCHW"))
    s, b = _bn_fold(*params["bn_stem"])
    y = jnp.maximum(y * s[None, :, None, None] + b[None, :, None, None], 0.0)
    y = lax.reduce_window(y, -jnp.inf, lax.max, (1, 1, 3, 3), (1, 1, 2, 2),
                          ((0, 0), (0, 0), (1, 1), (1, 1)))
    z = jnp.mean(y, axis=(2, 3))
    s1, b1 = _bn_fold(*params["bn1"])
    s2, b2 = _bn_fold(*params["bn2"])
    s3, b3 = _bn_fold(*params["bn3"])
    h = z * s1 + b1
    h = jnp.maximum(h @ params["w1"].T, 0.0)
    h = h * s2 + b2
    h = h @ params["w2"].T
    return h * s3 + b3


if __name__ == "__main__":
    key = jax.random.PRNGKey(0)
    kx, kp = jax.random.split(key)
    x = jax.random.normal(kx, (2, 3, 16, 16), jnp.float32)   # NCHW, like PyTorch
    params = init_params(kp, embedding_size=32, stem_channels=64)

    # block_pooled_rows=2 exercises the multi-step GAP accumulation path
    fwd = jax.jit(functools.partial(backbone_forward, block_pooled_rows=2))
    emb = jax.block_until_ready(fwd(x, params))
    ref = jax.block_until_ready(backbone_reference(x, params))

    assert emb.shape == (2, 32), emb.shape
    max_err = float(jnp.max(jnp.abs(emb - ref)))
    # bf16 MXU operands (f32 accumulation) -> loosened tolerance vs f32 reference
    assert jnp.allclose(emb, ref, atol=3e-2, rtol=3e-2), f"max_err={max_err}"
    print("KERNEL_OK")
</pallas_src>

<mosaic_0001>
module attributes {stable_mosaic.version = 11 : i64} {
  func.func @_fused_stem_neck_kernel(%arg0: i32, %arg1: i32, %arg2: memref<1x6x8x256xbf16, #tpu.memory_space<vmem>>, %arg3: memref<256x128xbf16, #tpu.memory_space<vmem>>, %arg4: memref<1x128xf32, #tpu.memory_space<vmem>>, %arg5: memref<128x128xf32, #tpu.memory_space<vmem>>, %arg6: memref<1x128xf32, #tpu.memory_space<vmem>>, %arg7: memref<128x128xf32, #tpu.memory_space<vmem>>, %arg8: memref<1x128xf32, #tpu.memory_space<vmem>>, %arg9: memref<1x1x128xf32, #tpu.memory_space<vmem>>, %arg10: memref<1x128xf32, #tpu.memory_space<vmem>>) attributes {dimension_semantics = [#tpu.dimension_semantics<parallel>, #tpu.dimension_semantics<arbitrary>], iteration_bounds = array<i64: 2, 2>, scalar_prefetch = 0 : i64, scratch_operands = 1 : i64, tpu.core_type = #tpu.core_type<tc>, window_params = [{transform_indices = @transform_0, window_bounds = array<i64: 1, 6, 8, 256>}, {pipeline_mode = #tpu.pipeline_mode<synchronous>, transform_indices = @transform_1, window_bounds = array<i64: 256, 128>}, {pipeline_mode = #tpu.pipeline_mode<synchronous>, transform_indices = @transform_2, window_bounds = array<i64: 1, 128>}, {pipeline_mode = #tpu.pipeline_mode<synchronous>, transform_indices = @transform_3, window_bounds = array<i64: 128, 128>}, {pipeline_mode = #tpu.pipeline_mode<synchronous>, transform_indices = @transform_4, window_bounds = array<i64: 1, 128>}, {pipeline_mode = #tpu.pipeline_mode<synchronous>, transform_indices = @transform_5, window_bounds = array<i64: 128, 128>}, {pipeline_mode = #tpu.pipeline_mode<synchronous>, transform_indices = @transform_6, window_bounds = array<i64: 1, 128>}, {transform_indices = @transform_7, window_bounds = array<i64: 1, 1, 128>}]} {
    %c0_i32 = arith.constant 0 : i32
    %0 = arith.cmpi eq, %arg1, %c0_i32 : i32
    %1 = arith.extui %0 : i1 to i32
    %c0_i32_0 = arith.constant 0 : i32
    %2 = arith.cmpi ne, %1, %c0_i32_0 : i32
    scf.if %2 {
      %cst_50 = arith.constant 0.000000e+00 : f32
      %103 = vector.broadcast %cst_50 : f32 to vector<1x128xf32>
      %c0_51 = arith.constant 0 : index
      %c0_52 = arith.constant 0 : index
      %104 = vector.load %arg10[%c0_51, %c0_52] : memref<1x128xf32, #tpu.memory_space<vmem>>, vector<1x128xf32>
      tpu.vector_store %arg10[%c0_51, %c0_52], %103 {strides = array<i32>} : memref<1x128xf32, #tpu.memory_space<vmem>>, vector<1x128xf32>,
    } else {
    }
    %c0 = arith.constant 0 : index
    %c0_1 = arith.constant 0 : index
    %3 = vector.load %arg3[%c0, %c0_1] : memref<256x128xbf16, #tpu.memory_space<vmem>>, vector<256x128xbf16>
    %c0_2 = arith.constant 0 : index
    %c0_3 = arith.constant 0 : index
    %4 = vector.load %arg4[%c0_2, %c0_3] : memref<1x128xf32, #tpu.memory_space<vmem>>, vector<1x128xf32>
    %5 = tpu.iota {dimensions = array<i32: 0>} : vector<8x128xi32>
    %c2_i32 = arith.constant 2 : i32
    %c0_i32_4 = arith.constant 0 : i32
    %6 = arith.cmpi eq, %c2_i32, %c0_i32_4 : i32
    %c1_i32 = arith.constant 1 : i32
    %7 = arith.select %6, %c1_i32, %c2_i32 : i32
    %8 = vector.broadcast %7 : i32 to vector<8x128xi32>
    %9 = arith.remsi %5, %8 : vector<8x128xi32>
    %c0_i32_5 = arith.constant 0 : i32
    %10 = vector.broadcast %c0_i32_5 : i32 to vector<8x128xi32>
    %11 = arith.cmpi ne, %9, %10 : vector<8x128xi32>
    %c0_i32_6 = arith.constant 0 : i32
    %12 = vector.broadcast %c0_i32_6 : i32 to vector<8x128xi32>
    %13 = arith.cmpi slt, %9, %12 : vector<8x128xi32>
    %c0_i32_7 = arith.constant 0 : i32
    %14 = arith.cmpi slt, %7, %c0_i32_7 : i32
    %15 = vector.broadcast %14 : i1 to vector<8x128xi1>
    %16 = vector.broadcast %15 : vector<8x128xi1> to vector<8x128xi1>
    %17 = arith.xori %13, %16 : vector<8x128xi1>
    %18 = arith.andi %17, %11 : vector<8x128xi1>
    %19 = vector.broadcast %7 : i32 to vector<8x128xi32>
    %20 = arith.addi %9, %19 : vector<8x128xi32>
    %21 = arith.select %18, %20, %9 : vector<8x128xi1>, vector<8x128xi32>
    %c0_i32_8 = arith.constant 0 : i32
    %22 = vector.broadcast %c0_i32_8 : i32 to vector<8x128xi32>
    %23 = arith.cmpi eq, %21, %22 : vector<8x128xi32>
    %cst = arith.constant 0.000000e+00 : f32
    %24 = vector.broadcast %cst : f32 to vector<1x128xf32>
    %c0_9 = arith.constant 0 : index
    %c0_10 = arith.constant 0 : index
    %c0_11 = arith.constant 0 : index
    %c0_12 = arith.constant 0 : index
    %25 = vector.load %arg2[%c0_9, %c0_10, %c0_11, %c0_12] : memref<1x6x8x256xbf16, #tpu.memory_space<vmem>>, vector<1x1x8x256xbf16>
    %26 = vector.shape_cast %25 : vector<1x1x8x256xbf16> to vector<8x256xbf16>
    %cst_13 = arith.constant dense<0.000000e+00> : vector<8x128xf32>
    %27 = tpu.matmul %26, %3, %cst_13 {dimension_numbers = #tpu.dot_dimension_numbers<[1], [0], [0], [1], [0, 0, 1, 1], [], []>} : vector<8x256xbf16>, vector<256x128xbf16>, vector<8x128xf32> -> vector<8x128xf32>
    %28 = vector.broadcast %4 : vector<1x128xf32> to vector<8x128xf32>
    %29 = arith.addf %27, %28 : vector<8x128xf32>
    %cst_14 = arith.constant 0.000000e+00 : f32
    %30 = vector.broadcast %cst_14 : f32 to vector<8x128xf32>
    %31 = arith.maximumf %29, %30 : vector<8x128xf32>
    %c0_15 = arith.constant 0 : index
    %c1 = arith.constant 1 : index
    %c0_16 = arith.constant 0 : index
    %c0_17 = arith.constant 0 : index
    %32 = vector.load %arg2[%c0_15, %c1, %c0_16, %c0_17] : memref<1x6x8x256xbf16, #tpu.memory_space<vmem>>, vector<1x1x8x256xbf16>
    %33 = vector.shape_cast %32 : vector<1x1x8x256xbf16> to vector<8x256xbf16>
    %cst_18 = arith.constant dense<0.000000e+00> : vector<8x128xf32>
    %34 = tpu.matmul %33, %3, %cst_18 {dimension_numbers = #tpu.dot_dimension_numbers<[1], [0], [0], [1], [0, 0, 1, 1], [], []>} : vector<8x256xbf16>, vector<256x128xbf16>, vector<8x128xf32> -> vector<8x128xf32>
    %35 = vector.broadcast %4 : vector<1x128xf32> to vector<8x128xf32>
    %36 = arith.addf %34, %35 : vector<8x128xf32>
    %cst_19 = arith.constant 0.000000e+00 : f32
    %37 = vector.broadcast %cst_19 : f32 to vector<8x128xf32>
    %38 = arith.maximumf %36, %37 : vector<8x128xf32>
    %39 = arith.maximumf %31, %38 : vector<8x128xf32>
    %c0_20 = arith.constant 0 : index
    %c2 = arith.constant 2 : index
    %c0_21 = arith.constant 0 : index
    %c0_22 = arith.constant 0 : index
    %40 = vector.load %arg2[%c0_20, %c2, %c0_21, %c0_22] : memref<1x6x8x256xbf16, #tpu.memory_space<vmem>>, vector<1x1x8x256xbf16>
    %41 = vector.shape_cast %40 : vector<1x1x8x256xbf16> to vector<8x256xbf16>
    %cst_23 = arith.constant dense<0.000000e+00> : vector<8x128xf32>
    %42 = tpu.matmul %41, %3, %cst_23 {dimension_numbers = #tpu.dot_dimension_numbers<[1], [0], [0], [1], [0, 0, 1, 1], [], []>} : vector<8x256xbf16>, vector<256x128xbf16>, vector<8x128xf32> -> vector<8x128xf32>
    %43 = vector.broadcast %4 : vector<1x128xf32> to vector<8x128xf32>
    %44 = arith.addf %42, %43 : vector<8x128xf32>
    %cst_24 = arith.constant 0.000000e+00 : f32
    %45 = vector.broadcast %cst_24 : f32 to vector<8x128xf32>
    %46 = arith.maximumf %44, %45 : vector<8x128xf32>
    %47 = arith.maximumf %39, %46 : vector<8x128xf32>
    %48 = vector.extract_strided_slice %47 {offsets = [0, 0], sizes = [1, 128], strides = [1, 1]} : vector<8x128xf32> to vector<1x128xf32>
    %49 = vector.extract_strided_slice %47 {offsets = [0, 0], sizes = [7, 128], strides = [1, 1]} : vector<8x128xf32> to vector<7x128xf32>
    %50 = tpu.concatenate %48, %49 in 0 : vector<1x128xf32>, vector<7x128xf32> -> vector<8x128xf32>
    %51 = vector.extract_strided_slice %47 {offsets = [1, 0], sizes = [7, 128], strides = [1, 1]} : vector<8x128xf32> to vector<7x128xf32>
    %52 = vector.extract_strided_slice %47 {offsets = [7, 0], sizes = [1, 128], strides = [1, 1]} : vector<8x128xf32> to vector<1x128xf32>
    %53 = tpu.concatenate %51, %52 in 0 : vector<7x128xf32>, vector<1x128xf32> -> vector<8x128xf32>
    %54 = arith.maximumf %50, %47 : vector<8x128xf32>
    %55 = arith.maximumf %54, %53 : vector<8x128xf32>
    %cst_25 = arith.constant 0.000000e+00 : f32
    %56 = vector.broadcast %cst_25 : f32 to vector<8x128xf32>
    %57 = arith.select %23, %55, %56 : vector<8x128xi1>, vector<8x128xf32>
    %cst_26 = arith.constant dense<0.000000e+00> : vector<128xf32>
    %58 = vector.multi_reduction <add>, %57, %cst_26 [0] : vector<8x128xf32> to vector<128xf32>
    %59 = vector.shape_cast %58 : vector<128xf32> to vector<1x128xf32>
    %60 = arith.addf %24, %59 : vector<1x128xf32>
    %c0_27 = arith.constant 0 : index
    %c3 = arith.constant 3 : index
    %c0_28 = arith.constant 0 : index
    %c0_29 = arith.constant 0 : index
    %61 = vector.load %arg2[%c0_27, %c3, %c0_28, %c0_29] : memref<1x6x8x256xbf16, #tpu.memory_space<vmem>>, vector<1x1x8x256xbf16>
    %62 = vector.shape_cast %61 : vector<1x1x8x256xbf16> to vector<8x256xbf16>
    %cst_30 = arith.constant dense<0.000000e+00> : vector<8x128xf32>
    %63 = tpu.matmul %62, %3, %cst_30 {dimension_numbers = #tpu.dot_dimension_numbers<[1], [0], [0], [1], [0, 0, 1, 1], [], []>} : vector<8x256xbf16>, vector<256x128xbf16>, vector<8x128xf32> -> vector<8x128xf32>
    %64 = vector.broadcast %4 : vector<1x128xf32> to vector<8x128xf32>
    %65 = arith.addf %63, %64 : vector<8x128xf32>
    %cst_31 = arith.constant 0.000000e+00 : f32
    %66 = vector.broadcast %cst_31 : f32 to vector<8x128xf32>
    %67 = arith.maximumf %65, %66 : vector<8x128xf32>
    %c0_32 = arith.constant 0 : index
    %c4 = arith.constant 4 : index
    %c0_33 = arith.constant 0 : index
    %c0_34 = arith.constant 0 : index
    %68 = vector.load %arg2[%c0_32, %c4, %c0_33, %c0_34] : memref<1x6x8x256xbf16, #tpu.memory_space<vmem>>, vector<1x1x8x256xbf16>
    %69 = vector.shape_cast %68 : vector<1x1x8x256xbf16> to vector<8x256xbf16>
    %cst_35 = arith.constant dense<0.000000e+00> : vector<8x128xf32>
    %70 = tpu.matmul %69, %3, %cst_35 {dimension_numbers = #tpu.dot_dimension_numbers<[1], [0], [0], [1], [0, 0, 1, 1], [], []>} : vector<8x256xbf16>, vector<256x128xbf16>, vector<8x128xf32> -> vector<8x128xf32>
    %71 = vector.broadcast %4 : vector<1x128xf32> to vector<8x128xf32>
    %72 = arith.addf %70, %71 : vector<8x128xf32>
    %cst_36 = arith.constant 0.000000e+00 : f32
    %73 = vector.broadcast %cst_36 : f32 to vector<8x128xf32>
    %74 = arith.maximumf %72, %73 : vector<8x128xf32>
    %75 = arith.maximumf %67, %74 : vector<8x128xf32>
    %c0_37 = arith.constant 0 : index
    %c5 = arith.constant 5 : index
    %c0_38 = arith.constant 0 : index
    %c0_39 = arith.constant 0 : index
    %76 = vector.load %arg2[%c0_37, %c5, %c0_38, %c0_39] : memref<1x6x8x256xbf16, #tpu.memory_space<vmem>>, vector<1x1x8x256xbf16>
    %77 = vector.shape_cast %76 : vector<1x1x8x256xbf16> to vector<8x256xbf16>
    %cst_40 = arith.constant dense<0.000000e+00> : vector<8x128xf32>
    %78 = tpu.matmul %77, %3, %cst_40 {dimension_numbers = #tpu.dot_dimension_numbers<[1], [0], [0], [1], [0, 0, 1, 1], [], []>} : vector<8x256xbf16>, vector<256x128xbf16>, vector<8x128xf32> -> vector<8x128xf32>
    %79 = vector.broadcast %4 : vector<1x128xf32> to vector<8x128xf32>
    %80 = arith.addf %78, %79 : vector<8x128xf32>
    %cst_41 = arith.constant 0.000000e+00 : f32
    %81 = vector.broadcast %cst_41 : f32 to vector<8x128xf32>
    %82 = arith.maximumf %80, %81 : vector<8x128xf32>
    %83 = arith.maximumf %75, %82 : vector<8x128xf32>
    %84 = vector.extract_strided_slice %83 {offsets = [0, 0], sizes = [1, 128], strides = [1, 1]} : vector<8x128xf32> to vector<1x128xf32>
    %85 = vector.extract_strided_slice %83 {offsets = [0, 0], sizes = [7, 128], strides = [1, 1]} : vector<8x128xf32> to vector<7x128xf32>
    %86 = tpu.concatenate %84, %85 in 0 : vector<1x128xf32>, vector<7x128xf32> -> vector<8x128xf32>
    %87 = vector.extract_strided_slice %83 {offsets = [1, 0], sizes = [7, 128], strides = [1, 1]} : vector<8x128xf32> to vector<7x128xf32>
    %88 = vector.extract_strided_slice %83 {offsets = [7, 0], sizes = [1, 128], strides = [1, 1]} : vector<8x128xf32> to vector<1x128xf32>
    %89 = tpu.concatenate %87, %88 in 0 : vector<7x128xf32>, vector<1x128xf32> -> vector<8x128xf32>
    %90 = arith.maximumf %86, %83 : vector<8x128xf32>
    %91 = arith.maximumf %90, %89 : vector<8x128xf32>
    %cst_42 = arith.constant 0.000000e+00 : f32
    %92 = vector.broadcast %cst_42 : f32 to vector<8x128xf32>
    %93 = arith.select %23, %91, %92 : vector<8x128xi1>, vector<8x128xf32>
    %cst_43 = arith.constant dense<0.000000e+00> : vector<128xf32>
    %94 = vector.multi_reduction <add>, %93, %cst_43 [0] : vector<8x128xf32> to vector<128xf32>
    %95 = vector.shape_cast %94 : vector<128xf32> to vector<1x128xf32>
    %96 = arith.addf %60, %95 : vector<1x128xf32>
    %c0_44 = arith.constant 0 : index
    %c0_45 = arith.constant 0 : index
    %97 = vector.load %arg10[%c0_44, %c0_45] : memref<1x128xf32, #tpu.memory_space<vmem>>, vector<1x128xf32>
    %98 = arith.addf %97, %96 : vector<1x128xf32>
    %c0_46 = arith.constant 0 : index
    %c0_47 = arith.constant 0 : index
    %99 = vector.load %arg10[%c0_46, %c0_47] : memref<1x128xf32, #tpu.memory_space<vmem>>, vector<1x128xf32>
    tpu.vector_store %arg10[%c0_46, %c0_47], %98 {strides = array<i32>} : memref<1x128xf32, #tpu.memory_space<vmem>>, vector<1x128xf32>,
    %c1_i32_48 = arith.constant 1 : i32
    %100 = arith.cmpi eq, %arg1, %c1_i32_48 : i32
    %101 = arith.extui %100 : i1 to i32
    %c0_i32_49 = arith.constant 0 : i32
    %102 = arith.cmpi ne, %101, %c0_i32_49 : i32
    scf.if %102 {
      %c0_50 = arith.constant 0 : index
      %c0_51 = arith.constant 0 : index
      %103 = vector.load %arg10[%c0_50, %c0_51] : memref<1x128xf32, #tpu.memory_space<vmem>>, vector<1x128xf32>
      %cst_52 = arith.constant 6.250000e-02 : f32
      %104 = vector.broadcast %cst_52 : f32 to vector<1x128xf32>
      %105 = arith.mulf %103, %104 : vector<1x128xf32>
      %c0_53 = arith.constant 0 : index
      %c0_54 = arith.constant 0 : index
      %106 = vector.load %arg5[%c0_53, %c0_54] : memref<128x128xf32, #tpu.memory_space<vmem>>, vector<128x128xf32>
      %cst_55 = arith.constant dense<0.000000e+00> : vector<1x128xf32>
      %107 = tpu.matmul %105, %106, %cst_55 {dimension_numbers = #tpu.dot_dimension_numbers<[1], [0], [0], [1], [0, 0, 1, 1], [], []>} : vector<1x128xf32>, vector<128x128xf32>, vector<1x128xf32> -> vector<1x128xf32>
      %c0_56 = arith.constant 0 : index
      %c0_57 = arith.constant 0 : index
      %108 = vector.load %arg6[%c0_56, %c0_57] : memref<1x128xf32, #tpu.memory_space<vmem>>, vector<1x128xf32>
      %109 = arith.addf %107, %108 : vector<1x128xf32>
      %cst_58 = arith.constant 0.000000e+00 : f32
      %110 = vector.broadcast %cst_58 : f32 to vector<1x128xf32>
      %111 = arith.maximumf %109, %110 : vector<1x128xf32>
      %c0_59 = arith.constant 0 : index
      %c0_60 = arith.constant 0 : index
      %112 = vector.load %arg7[%c0_59, %c0_60] : memref<128x128xf32, #tpu.memory_space<vmem>>, vector<128x128xf32>
      %cst_61 = arith.constant dense<0.000000e+00> : vector<1x128xf32>
      %113 = tpu.matmul %111, %112, %cst_61 {dimension_numbers = #tpu.dot_dimension_numbers<[1], [0], [0], [1], [0, 0, 1, 1], [], []>} : vector<1x128xf32>, vector<128x128xf32>, vector<1x128xf32> -> vector<1x128xf32>
      %c0_62 = arith.constant 0 : index
      %c0_63 = arith.constant 0 : index
      %114 = vector.load %arg8[%c0_62, %c0_63] : memref<1x128xf32, #tpu.memory_space<vmem>>, vector<1x128xf32>
      %115 = arith.addf %113, %114 : vector<1x128xf32>
      %c0_64 = arith.constant 0 : index
      %c0_65 = arith.constant 0 : index
      %c0_66 = arith.constant 0 : index
      %116 = vector.load %arg9[%c0_64, %c0_65, %c0_66] : memref<1x1x128xf32, #tpu.memory_space<vmem>>, vector<1x1x128xf32>
      %117 = vector.shape_cast %116 : vector<1x1x128xf32> to vector<1x128xf32>
      %118 = vector.shape_cast %115 : vector<1x128xf32> to vector<1x1x128xf32>
      tpu.vector_store %arg9[%c0_64, %c0_65, %c0_66], %118 {strides = array<i32>} : memref<1x1x128xf32, #tpu.memory_space<vmem>>, vector<1x1x128xf32>,
    } else {
    }
    return
  }
  func.func @transform_0(%arg0: i32, %arg1: i32) -> (i32, i32, i32, i32) {
    %c0_i32 = arith.constant 0 : i32
    %c0_i32_0 = arith.constant 0 : i32
    %c0_i32_1 = arith.constant 0 : i32
    return %arg0, %arg1, %c0_i32, %c0_i32_0 : i32, i32, i32, i32
  }
  func.func @transform_1(%arg0: i32, %arg1: i32) -> (i32, i32) {
    %c0_i32 = arith.constant 0 : i32
    %c0_i32_0 = arith.constant 0 : i32
    %c0_i32_1 = arith.constant 0 : i32
    return %c0_i32, %c0_i32_0 : i32, i32
  }
  func.func @transform_2(%arg0: i32, %arg1: i32) -> (i32, i32) {
    %c0_i32 = arith.constant 0 : i32
    %c0_i32_0 = arith.constant 0 : i32
    %c0_i32_1 = arith.constant 0 : i32
    return %c0_i32, %c0_i32_0 : i32, i32
  }
  func.func @transform_3(%arg0: i32, %arg1: i32) -> (i32, i32) {
    %c0_i32 = arith.constant 0 : i32
    %c0_i32_0 = arith.constant 0 : i32
    %c0_i32_1 = arith.constant 0 : i32
    return %c0_i32, %c0_i32_0 : i32, i32
  }
  func.func @transform_4(%arg0: i32, %arg1: i32) -> (i32, i32) {
    %c0_i32 = arith.constant 0 : i32
    %c0_i32_0 = arith.constant 0 : i32
    %c0_i32_1 = arith.constant 0 : i32
    return %c0_i32, %c0_i32_0 : i32, i32
  }
  func.func @transform_5(%arg0: i32, %arg1: i32) -> (i32, i32) {
    %c0_i32 = arith.constant 0 : i32
    %c0_i32_0 = arith.constant 0 : i32
    %c0_i32_1 = arith.constant 0 : i32
    return %c0_i32, %c0_i32_0 : i32, i32
  }
  func.func @transform_6(%arg0: i32, %arg1: i32) -> (i32, i32) {
    %c0_i32 = arith.constant 0 : i32
    %c0_i32_0 = arith.constant 0 : i32
    %c0_i32_1 = arith.constant 0 : i32
    return %c0_i32, %c0_i32_0 : i32, i32
  }
  func.func @transform_7(%arg0: i32, %arg1: i32) -> (i32, i32, i32) {
    %c0_i32 = arith.constant 0 : i32
    %c0_i32_0 = arith.constant 0 : i32
    %c0_i32_1 = arith.constant 0 : i32
    return %arg0, %c0_i32, %c0_i32_0 : i32, i32, i32
  }
}

</mosaic_0001>

<llo_original>
// kernel: backbone_forward.1
$region0: #{backbone_forward.1}
  #allocation0 [shape = 'u32[]', space=smem, size = 0x4, offset = 0x4, fixed_abs, tag = 'smem constant byte address 0x4 - core index']
  #allocation1 [shape = 'u32[72,128]{1,0:T(1,128)}', space=vmem, size = 0x9000, scoped, tag = 'internal scratch']
  #allocation2 [shape = 'f32[1,128]{1,0:T(1,128)}', space=vmem, size = 0x200, scoped, tag = 'scratch operand']
  %s0 = inlined_call_operand.vmem [shape: bf16[2,12,8,256], index: 0, kind: input, shape index: {}]
  %s1 = inlined_call_operand.vmem [shape: bf16[256,128], index: 1, kind: input, shape index: {}]
  %s2 = inlined_call_operand.vmem [shape: f32[1,128], index: 2, kind: input, shape index: {}]
  %s3 = inlined_call_operand.vmem [shape: f32[128,128], index: 3, kind: input, shape index: {}]
  %s4 = inlined_call_operand.vmem [shape: f32[1,128], index: 4, kind: input, shape index: {}]
  %s5 = inlined_call_operand.vmem [shape: f32[128,128], index: 5, kind: input, shape index: {}]
  %s6 = inlined_call_operand.vmem [shape: f32[1,128], index: 6, kind: input, shape index: {}]
  %s7 = inlined_call_operand.hbm [shape: f32[2,1,128], index: 7, kind: output, shape index: {}]
  %s8 = sld [smem:[#allocation0]]
  $region69: #{backbone_forward.1} parent=0
    _
  %s10 = ssub.s32 1, %s8
  %s11 = scalar_select 0, %s10, %s8
  $region1: #{backbone_forward.1} parent=0
    #allocation3 [shape = 'u8[1024]{0}', space=vmem, size = 0x400, scoped, tag = 'output window, operand 0']
    #allocation4 [shape = 's32[2]{0}', space=sflag, size = 0x8, scoped, tag = 'scoped memory for backbone_forward.1']
    %12 = vsyncpa [#allocation4], 0
    %s13 = scalar_lea.sflag [#allocation4], 1
    %14 = vsyncpa %s13, 0
    loop: start=0, step=1, limit=6
    $region2: #{backbone_forward.1} parent=1 // loop_pre_header
      _
    $region3: #{backbone_forward.1} parent=1 // loop_header
      %s16 = sphi 0, %s20
      %p17 = scmp.ge.s32.totalorder %s16, 6
      %s23 = sphi 0, %s35
      %s24 = sphi 0, %s31
      %s25 = sphi 0, %s23
      %s26 = sphi 0, %s24
      %s27 = sphi 0, %s25
      %s28 = sphi 0, %s26
      %s40 = sphi 0, %s42
      %s43 = sphi 0, %s40
      %s44 = sphi 0, %s43
      %s60 = sphi 0, %s44
      %s64 = sphi 0, %s64
      %s66 = sphi 0, %s64
      %s67 = sphi 0, %s66
      %s81 = sphi 0, %s67
      %s85 = sphi 0, %s85
      %s87 = sphi 0, %s85
      %s88 = sphi 0, %s87
      %s102 = sphi 0, %s88
      %s106 = sphi 0, %s106
      %s108 = sphi 0, %s106
      %s109 = sphi 0, %s108
      %s123 = sphi 0, %s109
      %s127 = sphi 0, %s127
      %s129 = sphi 0, %s127
      %s130 = sphi 0, %s129
      %s144 = sphi 0, %s130
      %s148 = sphi 0, %s148
      %s150 = sphi 0, %s148
      %s151 = sphi 0, %s150
      %s165 = sphi 0, %s151
      %s169 = sphi 0, %s169
      %s171 = sphi 0, %s169
      %s172 = sphi 0, %s171
      %s186 = sphi 0, %s172
      %s192 = sphi 0, %s194
      %s195 = sphi 0, %s192
      %s196 = sphi 0, %s195
      %s212 = sphi 0, %s196
    $region4: #{backbone_forward.1} parent=1 // loop_header_branch
      %19 = sbr.rel (%p17) target = $region8
    $region5: #{backbone_forward.1} parent=1 // loop_body
      %s21 = ssub.s32 %s16, 1
      %s22 = ssub.s32 %s16, 2
      %s29 = sadd.s32 1, %s24
      %p30 = scmp.ge.s32.totalorder %s29, 2
      %s31 = scalar_select %p30, 0, %s29
      %s32 = sadd.s32 1, %s23
      %s33 = scalar_select %p30, %s32, %s23
      %p34 = scmp.ge.s32.totalorder %s33, 2
      %s35 = scalar_select %p34, 0, %s33
      %s36 = ssub.s32 %s23, %s35
      %s37 = ssub.s32 %s24, %s31
      %s38 = sor.u32 %s36, %s37
      %p39 = scmp.eq.s32.totalorder %s38, 0
      %s41 = sadd.s32 %s40, 1
      %s42 = scalar_select %p39, %s40, %s41
      %p45 = pneg %p39
      %p46 = scmp.eq.s32.totalorder %s16, 3
      %p47 = por %p45, %p46
      %p48 = scmp.ne.s32.totalorder %s40, %s43
      %p49 = scmp.eq.s32.totalorder %s16, 0
      %p50 = por %p48, %p49
      %p51 = scmp.ne.s32.totalorder %s40, %s43
      %p52 = scmp.eq.s32.totalorder %s21, 3
      %p53 = por %p51, %p52
      %p54 = scmp.ne.s32.totalorder %s43, %s44
      %p55 = scmp.eq.s32.totalorder %s21, 0
      %p56 = por %p54, %p55
      %p57 = scmp.ne.s32.totalorder %s43, %s44
      %p58 = scmp.eq.s32.totalorder %s22, 3
      %p59 = por %p57, %p58
      %p61 = scmp.ne.s32.totalorder %s44, %s60
      %p62 = scmp.eq.s32.totalorder %s22, 0
      %p63 = por %p61, %p62
      %s65 = sadd.s32 %s64, 1
      %p68 = scmp.eq.s32.totalorder %s16, 3
      %p69 = scmp.ne.s32.totalorder %s64, %s66
      %p70 = scmp.eq.s32.totalorder %s16, 0
      %p71 = por %p69, %p70
      %p72 = scmp.ne.s32.totalorder %s64, %s66
      %p73 = scmp.eq.s32.totalorder %s21, 3
      %p74 = por %p72, %p73
      %p75 = scmp.ne.s32.totalorder %s66, %s67
      %p76 = scmp.eq.s32.totalorder %s21, 0
      %p77 = por %p75, %p76
      %p78 = scmp.ne.s32.totalorder %s66, %s67
      %p79 = scmp.eq.s32.totalorder %s22, 3
      %p80 = por %p78, %p79
      %p82 = scmp.ne.s32.totalorder %s67, %s81
      %p83 = scmp.eq.s32.totalorder %s22, 0
      %p84 = por %p82, %p83
      %s86 = sadd.s32 %s85, 1
      %p89 = scmp.eq.s32.totalorder %s16, 3
      %p90 = scmp.ne.s32.totalorder %s85, %s87
      %p91 = scmp.eq.s32.totalorder %s16, 0
      %p92 = por %p90, %p91
      %p93 = scmp.ne.s32.totalorder %s85, %s87
      %p94 = scmp.eq.s32.totalorder %s21, 3
      %p95 = por %p93, %p94
      %p96 = scmp.ne.s32.totalorder %s87, %s88
      %p97 = scmp.eq.s32.totalorder %s21, 0
      %p98 = por %p96, %p97
      %p99 = scmp.ne.s32.totalorder %s87, %s88
      %p100 = scmp.eq.s32.totalorder %s22, 3
      %p101 = por %p99, %p100
      %p103 = scmp.ne.s32.totalorder %s88, %s102
      %p104 = scmp.eq.s32.totalorder %s22, 0
      %p105 = por %p103, %p104
      %s107 = sadd.s32 %s106, 1
      %p110 = scmp.eq.s32.totalorder %s16, 3
      %p111 = scmp.ne.s32.totalorder %s106, %s108
      %p112 = scmp.eq.s32.totalorder %s16, 0
      %p113 = por %p111, %p112
      %p114 = scmp.ne.s32.totalorder %s106, %s108
      %p115 = scmp.eq.s32.totalorder %s21, 3
      %p116 = por %p114, %p115
      %p117 = scmp.ne.s32.totalorder %s108, %s109
      %p118 = scmp.eq.s32.totalorder %s21, 0
      %p119 = por %p117, %p118
      %p120 = scmp.ne.s32.totalorder %s108, %s109
      %p121 = scmp.eq.s32.totalorder %s22, 3
      %p122 = por %p120, %p121
      %p124 = scmp.ne.s32.totalorder %s109, %s123
      %p125 = scmp.eq.s32.totalorder %s22, 0
      %p126 = por %p124, %p125
      %s128 = sadd.s32 %s127, 1
      %p131 = scmp.eq.s32.totalorder %s16, 3
      %p132 = scmp.ne.s32.totalorder %s127, %s129
      %p133 = scmp.eq.s32.totalorder %s16, 0
      %p134 = por %p132, %p133
      %p135 = scmp.ne.s32.totalorder %s127, %s129
      %p136 = scmp.eq.s32.totalorder %s21, 3
      %p137 = por %p135, %p136
      %p138 = scmp.ne.s32.totalorder %s129, %s130
      %p139 = scmp.eq.s32.totalorder %s21, 0
      %p140 = por %p138, %p139
      %p141 = scmp.ne.s32.totalorder %s129, %s130
      %p142 = scmp.eq.s32.totalorder %s22, 3
      %p143 = por %p141, %p142
      %p145 = scmp.ne.s32.totalorder %s130, %s144
      %p146 = scmp.eq.s32.totalorder %s22, 0
      %p147 = por %p145, %p146
      %s149 = sadd.s32 %s148, 1
      %p152 = scmp.eq.s32.totalorder %s16, 3
      %p153 = scmp.ne.s32.totalorder %s148, %s150
      %p154 = scmp.eq.s32.totalorder %s16, 0
      %p155 = por %p153, %p154
      %p156 = scmp.ne.s32.totalorder %s148, %s150
      %p157 = scmp.eq.s32.totalorder %s21, 3
      %p158 = por %p156, %p157
      %p159 = scmp.ne.s32.totalorder %s150, %s151
      %p160 = scmp.eq.s32.totalorder %s21, 0
      %p161 = por %p159, %p160
      %p162 = scmp.ne.s32.totalorder %s150, %s151
      %p163 = scmp.eq.s32.totalorder %s22, 3
      %p164 = por %p162, %p163
      %p166 = scmp.ne.s32.totalorder %s151, %s165
      %p167 = scmp.eq.s32.totalorder %s22, 0
      %p168 = por %p166, %p167
      %s170 = sadd.s32 %s169, 1
      %p173 = scmp.eq.s32.totalorder %s16, 3
      %p174 = scmp.ne.s32.totalorder %s169, %s171
      %p175 = scmp.eq.s32.totalorder %s16, 0
      %p176 = por %p174, %p175
      %p177 = scmp.ne.s32.totalorder %s169, %s171
      %p178 = scmp.eq.s32.totalorder %s21, 3
      %p179 = por %p177, %p178
      %p180 = scmp.ne.s32.totalorder %s171, %s172
      %p181 = scmp.eq.s32.totalorder %s21, 0
      %p182 = por %p180, %p181
      %p183 = scmp.ne.s32.totalorder %s171, %s172
      %p184 = scmp.eq.s32.totalorder %s22, 3
      %p185 = por %p183, %p184
      %p187 = scmp.ne.s32.totalorder %s172, %s186
      %p188 = scmp.eq.s32.totalorder %s22, 0
      %p189 = por %p187, %p188
      %s190 = ssub.s32 %s23, %s35
      %p191 = scmp.eq.s32.totalorder %s190, 0
      %s193 = sadd.s32 %s192, 1
      %s194 = scalar_select %p191, %s192, %s193
      %p197 = pneg %p191
      %p198 = scmp.eq.s32.totalorder %s16, 3
      %p199 = por %p197, %p198
      %p200 = scmp.ne.s32.totalorder %s192, %s195
      %p201 = scmp.eq.s32.totalorder %s16, 0
      %p202 = por %p200, %p201
      %p203 = scmp.ne.s32.totalorder %s192, %s195
      %p204 = scmp.eq.s32.totalorder %s21, 3
      %p205 = por %p203, %p204
      %p206 = scmp.ne.s32.totalorder %s195, %s196
      %p207 = scmp.eq.s32.totalorder %s21, 0
      %p208 = por %p206, %p207
      %p209 = scmp.ne.s32.totalorder %s195, %s196
      %p210 = scmp.eq.s32.totalorder %s22, 3
      %p211 = por %p209, %p210
      %p213 = scmp.ne.s32.totalorder %s196, %s212
      %p214 = scmp.eq.s32.totalorder %s22, 0
      %p215 = por %p213, %p214
      %p216 = scmp.le.s32.totalorder 1, %s16
      %p217 = scmp.lt.s32.totalorder %s16, 5
      %p218 = pnand %p216, %p217
      %p219 = pneg %p218
      // Predicated region
      $region9: #{backbone_forward.1} parent=5 // pred_check
        _
      $region10: #{backbone_forward.1} parent=5 // pred_check_branch
        %221 = sbr.rel (%p218) target = $region12
      $region11: #{backbone_forward.1} parent=5 // pred_region
        %s222 = ssub.s32 %s16, 1
        // Predicated region
        $region13: #{backbone_forward.1} parent=11 // pred_check
          %p223 = pneg %p77
        $region14: #{backbone_forward.1} parent=11 // pred_check_branch
          %225 = sbr.rel (%p223) target = $region16
        $region15: #{backbone_forward.1} parent=11 // pred_region
          _
        $region16: #{backbone_forward.1} parent=11 // pred_fallthru
          _
        // Predicated region
        $region17: #{backbone_forward.1} parent=11 // pred_check
          %p226 = pneg %p98
        $region18: #{backbone_forward.1} parent=11 // pred_check_branch
          %228 = sbr.rel (%p226) target = $region20
        $region19: #{backbone_forward.1} parent=11 // pred_region
          _
        $region20: #{backbone_forward.1} parent=11 // pred_fallthru
          _
        // Predicated region
        $region21: #{backbone_forward.1} parent=11 // pred_check
          %p229 = pneg %p119
        $region22: #{backbone_forward.1} parent=11 // pred_check_branch
          %231 = sbr.rel (%p229) target = $region24
        $region23: #{backbone_forward.1} parent=11 // pred_region
          _
        $region24: #{backbone_forward.1} parent=11 // pred_fallthru
          _
        // Predicated region
        $region25: #{backbone_forward.1} parent=11 // pred_check
          %p232 = pneg %p140
        $region26: #{backbone_forward.1} parent=11 // pred_check_branch
          %234 = sbr.rel (%p232) target = $region28
        $region27: #{backbone_forward.1} parent=11 // pred_region
          _
        $region28: #{backbone_forward.1} parent=11 // pred_fallthru
          _
        // Predicated region
        $region29: #{backbone_forward.1} parent=11 // pred_check
          %p235 = pneg %p161
        $region30: #{backbone_forward.1} parent=11 // pred_check_branch
          %237 = sbr.rel (%p235) target = $region32
        $region31: #{backbone_forward.1} parent=11 // pred_region
          _
        $region32: #{backbone_forward.1} parent=11 // pred_fallthru
          _
        // Predicated region
        $region33: #{backbone_forward.1} parent=11 // pred_check
          %p238 = pneg %p182
        $region34: #{backbone_forward.1} parent=11 // pred_check_branch
          %240 = sbr.rel (%p238) target = $region36
        $region35: #{backbone_forward.1} parent=11 // pred_region
          _
        $region36: #{backbone_forward.1} parent=11 // pred_fallthru
          _
      $region12: #{backbone_forward.1} parent=5 // pred_fallthru
        _
      %p241 = scmp.lt.s32.totalorder %s16, 4
      // Predicated region
      $region37: #{backbone_forward.1} parent=5 // pred_check
        %p242 = pneg %p241
      $region38: #{backbone_forward.1} parent=5 // pred_check_branch
        %244 = sbr.rel (%p242) target = $region40
      $region39: #{backbone_forward.1} parent=5 // pred_region
        // Predicated region
        $region41: #{backbone_forward.1} parent=39 // pred_check
          %p245 = pneg %p50
        $region42: #{backbone_forward.1} parent=39 // pred_check_branch
          %247 = sbr.rel (%p245) target = $region44
        $region43: #{backbone_forward.1} parent=39 // pred_region
          %s248 = smul.u32 6, %s24
          %p249 = scmp.lt.s32.totalorder %s23, 1
          %s250 = scalar_select %p249, %s23, 1
          %p251 = scmp.lt.s32.totalorder %s248, 11
          %s252 = scalar_select %p251, %s248, 11
          %s253 = smul.addr %s252, 2
          %s254 = smul.addr %s250, 24
          %s255 = sadd.s32 %s253, %s254
          %s256 = smul.addr %s255, 4
          %s257 = scalar_lea.vmem %s0, %s256
          %s258 = smul.u32 6, %s24
        $region44: #{backbone_forward.1} parent=39 // pred_fallthru
          _
      $region40: #{backbone_forward.1} parent=5 // pred_fallthru
        _
      %p259 = scmp.le.s32.totalorder 1, %s16
      %p260 = scmp.lt.s32.totalorder %s16, 5
      %p261 = pnand %p259, %p260
      %p262 = pneg %p261
      // Predicated region
      $region45: #{backbone_forward.1} parent=5 // pred_check
        _
      $region46: #{backbone_forward.1} parent=5 // pred_check_branch
        %264 = sbr.rel (%p261) target = $region48
      $region47: #{backbone_forward.1} parent=5 // pred_region
        %s265 = ssub.s32 %s16, 1
        %s266 = smul.u32 6, %s26
        %p267 = scmp.lt.s32.totalorder %s25, 1
        %s268 = scalar_select %p267, %s25, 1
        %p269 = scmp.lt.s32.totalorder %s266, 11
        %s270 = scalar_select %p269, %s266, 11
        %s271 = smul.addr %s270, 2
        %s272 = smul.addr %s268, 24
        %s273 = sadd.s32 %s271, %s272
        %s274 = smul.addr %s273, 4
        %s275 = scalar_lea.vmem %s0, %s274
        %p276 = pneg %p56
        %p277 = pneg %p53
        %p278 = pneg %p77
        %p279 = pneg %p74
        %p280 = pneg %p98
        %p281 = pneg %p95
        %p282 = pneg %p119
        %p283 = pneg %p116
        %p284 = pneg %p140
        %p285 = pneg %p137
        %p286 = pneg %p161
        %p287 = pneg %p158
        %p288 = pneg %p182
        %p289 = pneg %p179
        %p290 = pneg %p208
        %p291 = pneg %p205
        %s292 = sand.u32 %s195, 1
        %s293 = scalar_lea.sflag [#allocation4], %s292
        %s294 = sand.u32 %s195, 1
        %s295 = scalar_lea.vmem [#allocation3], %s294
        %s296 = smul.u32 6, %s26
        %p297 = scmp.lt.s32.totalorder %s25, 1
        %s298 = scalar_select %p297, %s25, 1
        %p299 = scmp.lt.s32.totalorder %s296, 11
        %s300 = scalar_select %p299, %s296, 11
        %s301 = smul.addr %s300, 2
        %s302 = smul.addr %s298, 24
        %s303 = sadd.s32 %s301, %s302
        %s304 = smul.addr %s303, 4
        %s305 = scalar_lea.vmem %s0, %s304
        %s306 = smul.u32 6, %s26
        %p307 = scmp.eq.s32.totalorder %s26, 0
        // Predicated region
        $region49: #{backbone_forward.1} parent=47 // pred_check
          %p308 = pneg %p307
        $region50: #{backbone_forward.1} parent=47 // pred_check_branch
          %310 = sbr.rel (%p308) target = $region52
        $region51: #{backbone_forward.1} parent=47 // pred_region
          %311 = vst [vmem:[#allocation2] sm:$0x1] 0.0
        $region52: #{backbone_forward.1} parent=47 // pred_fallthru
          _
        %v312 = vld [vmem:[%s1] sm:$0xf]
        %v313 = vld [vmem:[%s1 + $0x4] sm:$0xf]
        %v314 = vld [vmem:[%s1 + $0x8] sm:$0xf]
        %v315 = vld [vmem:[%s1 + $0xc] sm:$0xf]
        %v316 = vld [vmem:[%s1 + $0x10] sm:$0xf]
        %v317 = vld [vmem:[%s1 + $0x14] sm:$0xf]
        %v318 = vld [vmem:[%s1 + $0x18] sm:$0xf]
        %v319 = vld [vmem:[%s1 + $0x1c] sm:$0xf]
        %v320 = vld [vmem:[%s1 + $0x20] sm:$0xf]
        %v321 = vld [vmem:[%s1 + $0x24] sm:$0xf]
        %v322 = vld [vmem:[%s1 + $0x28] sm:$0xf]
        %v323 = vld [vmem:[%s1 + $0x2c] sm:$0xf]
        %v324 = vld [vmem:[%s1 + $0x30] sm:$0xf]
        %v325 = vld [vmem:[%s1 + $0x34] sm:$0xf]
        %v326 = vld [vmem:[%s1 + $0x38] sm:$0xf]
        %v327 = vld [vmem:[%s1 + $0x3c] sm:$0xf]
        %v328 = vld [vmem:[%s1 + $0x40] sm:$0xf]
        %v329 = vld [vmem:[%s1 + $0x44] sm:$0xf]
        %v330 = vld [vmem:[%s1 + $0x48] sm:$0xf]
        %v331 = vld [vmem:[%s1 + $0x4c] sm:$0xf]
        %v332 = vld [vmem:[%s1 + $0x50] sm:$0xf]
        %v333 = vld [vmem:[%s1 + $0x54] sm:$0xf]
        %v334 = vld [vmem:[%s1 + $0x58] sm:$0xf]
        %v335 = vld [vmem:[%s1 + $0x5c] sm:$0xf]
        %v336 = vld [vmem:[%s1 + $0x60] sm:$0xf]
        %v337 = vld [vmem:[%s1 + $0x64] sm:$0xf]
        %v338 = vld [vmem:[%s1 + $0x68] sm:$0xf]
        %v339 = vld [vmem:[%s1 + $0x6c] sm:$0xf]
        %v340 = vld [vmem:[%s1 + $0x70] sm:$0xf]
        %v341 = vld [vmem:[%s1 + $0x74] sm:$0xf]
        %v342 = vld [vmem:[%s1 + $0x78] sm:$0xf]
        %v343 = vld [vmem:[%s1 + $0x7c] sm:$0xf]
        %v344 = vld [vmem:[%s2] sm:$0x1]
        %v345 = vlaneseq
        %v346 = vshrl.u32 %v345, 7
        %vm347 = vcmp.lt.s32.totalorder %v346, 0
        %v348 = vsub.s32 0, %v346
        %v349 = vsel %vm347, %v348, %v346
        %v350 = vshrl.u32 %v349, 1
        %v351 = vand.u32 %v349, 1
        %v352 = vsub.s32 0, %v351
        %v353 = vsel %vm347, %v352, %v351
        %vm354 = vcmp.ne.s32.totalorder %v353, 0
        %vm355 = vcmp.lt.s32.totalorder %v353, 0
        %vm356 = vmand %vm355, %vm354
        %v357 = vadd.s32 %v353, 2
        %v358 = vsel %vm356, %v357, %v353
        %vm359 = vcmp.eq.s32.totalorder %v358, 0
        %v360 = vld [vmem:[%s305] sm:$0xff]
        %v362 = vperm.slane %v344, 0
        %v365 = vunpack.c.l.b16 %v360
        %v366 = vunpack.c.h.b16 %v360
        %v367 = vpack.c.b16 %v365, %v365
        %v368 = vpack.c.b16 %v366, %v366
        %v403 = vunpack.c.l.b16 %v312
        %v404 = vunpack.c.l.b16 %v313
        %v405 = vunpack.c.l.b16 %v314
        %v406 = vunpack.c.l.b16 %v315
        %v407 = vunpack.c.l.b16 %v316
        %v408 = vunpack.c.l.b16 %v317
        %v409 = vunpack.c.l.b16 %v318
        %v410 = vunpack.c.l.b16 %v319
        %v411 = vunpack.c.l.b16 %v320
        %v412 = vunpack.c.l.b16 %v321
        %v413 = vunpack.c.l.b16 %v322
        %v414 = vunpack.c.l.b16 %v323
        %v415 = vunpack.c.l.b16 %v324
        %v416 = vunpack.c.l.b16 %v325
        %v417 = vunpack.c.l.b16 %v326
        %v418 = vunpack.c.l.b16 %v327
        %v419 = vunpack.c.l.b16 %v328
        %v420 = vunpack.c.l.b16 %v329
        %v421 = vunpack.c.l.b16 %v330
        %v422 = vunpack.c.l.b16 %v331
        %v423 = vunpack.c.l.b16 %v332
        %v424 = vunpack.c.l.b16 %v333
        %v425 = vunpack.c.l.b16 %v334
        %v426 = vunpack.c.l.b16 %v335
        %v427 = vunpack.c.l.b16 %v336
        %v428 = vunpack.c.l.b16 %v337
        %v429 = vunpack.c.l.b16 %v338
        %v430 = vunpack.c.l.b16 %v339
        %v431 = vunpack.c.l.b16 %v340
        %v432 = vunpack.c.l.b16 %v341
        %v433 = vunpack.c.l.b16 %v342
        %v434 = vunpack.c.l.b16 %v343
        %v435 = vpack.c.b16 %v404, %v403
        %v436 = vpack.c.b16 %v406, %v405
        %v437 = vpack.c.b16 %v408, %v407
        %v438 = vpack.c.b16 %v410, %v409
        %v439 = vpack.c.b16 %v412, %v411
        %v440 = vpack.c.b16 %v414, %v413
        %v441 = vpack.c.b16 %v416, %v415
        %v442 = vpack.c.b16 %v418, %v417
        %v443 = vpack.c.b16 %v420, %v419
        %v444 = vpack.c.b16 %v422, %v421
        %v445 = vpack.c.b16 %v424, %v423
        %v446 = vpack.c.b16 %v426, %v425
        %v447 = vpack.c.b16 %v428, %v427
        %v448 = vpack.c.b16 %v430, %v429
        %v449 = vpack.c.b16 %v432, %v431
        %v450 = vpack.c.b16 %v434, %v433
        %467 = vmatpush.bf16.msra.mxu0 %v442
        %468 = vmatpush.bf16.msra.mxu0 %v441
        %469 = vmatpush.bf16.msra.mxu0 %v440
        %470 = vmatpush.bf16.msra.mxu0 %v439
        %471 = vmatpush.bf16.msra.mxu0 %v438
        %472 = vmatpush.bf16.msra.mxu0 %v437
        %473 = vmatpush.bf16.msra.mxu0 %v436
        %474 = vmatpush.bf16.msra.mxu0 %v435
        %475 = vmatmul.bf16.gmra.mxu0 %v367
        %v476 = vpop.f32.mrf.mxu0
        %v477 = vadd.f32 %v362, %v476
        %v478 = vpop.f32.mrf.mxu0
        %479 = vdwg.mxu0
        %480 = vmatpush.bf16.msra.mxu0 %v450
        %481 = vmatpush.bf16.msra.mxu0 %v449
        %482 = vmatpush.bf16.msra.mxu0 %v448
        %483 = vmatpush.bf16.msra.mxu0 %v447
        %484 = vmatpush.bf16.msra.mxu0 %v446
        %485 = vmatpush.bf16.msra.mxu0 %v445
        %486 = vmatpush.bf16.msra.mxu0 %v444
        %487 = vmatpush.bf16.msra.mxu0 %v443
        %488 = vmatmul.bf16.gmra.mxu0 %v368
        %v489 = vpop.f32.mrf.mxu0
        %v490 = vadd.f32 %v477, %v489
        %v491 = vpop.f32.mrf.mxu0
        %492 = vdwg.mxu0
        %v493 = vmax.f32 %v490, 0.0
        %s494 = scalar_lea.vmem %s305, 8
        %v495 = vld [vmem:[%s494] sm:$0xff]
        %v497 = vunpack.c.l.b16 %v495
        %v498 = vunpack.c.h.b16 %v495
        %v499 = vpack.c.b16 %v497, %v497
        %v500 = vpack.c.b16 %v498, %v498
        %503 = vmatpush.bf16.msra.mxu0 %v442
        %504 = vmatpush.bf16.msra.mxu0 %v441
        %505 = vmatpush.bf16.msra.mxu0 %v440
        %506 = vmatpush.bf16.msra.mxu0 %v439
        %507 = vmatpush.bf16.msra.mxu0 %v438
        %508 = vmatpush.bf16.msra.mxu0 %v437
        %509 = vmatpush.bf16.msra.mxu0 %v436
        %510 = vmatpush.bf16.msra.mxu0 %v435
        %511 = vmatmul.bf16.gmra.mxu0 %v499
        %v512 = vpop.f32.mrf.mxu0
        %v513 = vadd.f32 %v362, %v512
        %v514 = vpop.f32.mrf.mxu0
        %515 = vdwg.mxu0
        %516 = vmatpush.bf16.msra.mxu0 %v450
        %517 = vmatpush.bf16.msra.mxu0 %v449
        %518 = vmatpush.bf16.msra.mxu0 %v448
        %519 = vmatpush.bf16.msra.mxu0 %v447
        %520 = vmatpush.bf16.msra.mxu0 %v446
        %521 = vmatpush.bf16.msra.mxu0 %v445
        %522 = vmatpush.bf16.msra.mxu0 %v444
        %523 = vmatpush.bf16.msra.mxu0 %v443
        %524 = vmatmul.bf16.gmra.mxu0 %v500
        %v525 = vpop.f32.mrf.mxu0
        %v526 = vadd.f32 %v513, %v525
        %v527 = vpop.f32.mrf.mxu0
        %528 = vdwg.mxu0
        %v529 = vmax.f32 %v526, 0.0
        %v530 = vmax.f32 %v493, %v529
        %s531 = scalar_lea.vmem %s305, 16
        %v532 = vld [vmem:[%s531] sm:$0xff]
        %v534 = vunpack.c.l.b16 %v532
        %v535 = vunpack.c.h.b16 %v532
        %v536 = vpack.c.b16 %v534, %v534
        %v537 = vpack.c.b16 %v535, %v535
        %540 = vmatpush.bf16.msra.mxu0 %v442
        %541 = vmatpush.bf16.msra.mxu0 %v441
        %542 = vmatpush.bf16.msra.mxu0 %v440
        %543 = vmatpush.bf16.msra.mxu0 %v439
        %544 = vmatpush.bf16.msra.mxu0 %v438
        %545 = vmatpush.bf16.msra.mxu0 %v437
        %546 = vmatpush.bf16.msra.mxu0 %v436
        %547 = vmatpush.bf16.msra.mxu0 %v435
        %548 = vmatmul.bf16.gmra.mxu0 %v536
        %v549 = vpop.f32.mrf.mxu0
        %v550 = vadd.f32 %v362, %v549
        %v551 = vpop.f32.mrf.mxu0
        %552 = vdwg.mxu0
        %553 = vmatpush.bf16.msra.mxu0 %v450
        %554 = vmatpush.bf16.msra.mxu0 %v449
        %555 = vmatpush.bf16.msra.mxu0 %v448
        %556 = vmatpush.bf16.msra.mxu0 %v447
        %557 = vmatpush.bf16.msra.mxu0 %v446
        %558 = vmatpush.bf16.msra.mxu0 %v445
        %559 = vmatpush.bf16.msra.mxu0 %v444
        %560 = vmatpush.bf16.msra.mxu0 %v443
        %561 = vmatmul.bf16.gmra.mxu0 %v537
        %v562 = vpop.f32.mrf.mxu0
        %v563 = vadd.f32 %v550, %v562
        %v564 = vpop.f32.mrf.mxu0
        %565 = vdwg.mxu0
        %v566 = vmax.f32 %v563, 0.0
        %v567 = vmax.f32 %v530, %v566
        %v569 = vrot.slane %v567, 7
        %vm571 = vcmask 1040384
        %v572 = vsel %vm571, %v567, %v569
        %v573 = vrot.slane %v567, 1
        %vm575 = vcmask 1046528
        %v576 = vsel %vm575, %v573, %v567
        %v577 = vmax.f32 %v572, %v567
        %v578 = vmax.f32 %v577, %v576
        %v579 = vsel %vm359, %v578, 0.0
        %v580 = vrot.slane %v579, 4
        %v581 = vadd.f32 %v579, %v580
        %v582 = vrot.slane %v581, 2
        %v583 = vadd.f32 %v581, %v582
        %v584 = vrot.slane %v583, 1
        %v585 = vadd.f32 %v583, %v584
        %v586 = vadd.f32 %v585, 0.0
        %s587 = scalar_lea.vmem %s305, 24
        %v588 = vld [vmem:[%s587] sm:$0xff]
        %v590 = vunpack.c.l.b16 %v588
        %v591 = vunpack.c.h.b16 %v588
        %v592 = vpack.c.b16 %v590, %v590
        %v593 = vpack.c.b16 %v591, %v591
        %596 = vmatpush.bf16.msra.mxu0 %v442
        %597 = vmatpush.bf16.msra.mxu0 %v441
        %598 = vmatpush.bf16.msra.mxu0 %v440
        %599 = vmatpush.bf16.msra.mxu0 %v439
        %600 = vmatpush.bf16.msra.mxu0 %v438
        %601 = vmatpush.bf16.msra.mxu0 %v437
        %602 = vmatpush.bf16.msra.mxu0 %v436
        %603 = vmatpush.bf16.msra.mxu0 %v435
        %604 = vmatmul.bf16.gmra.mxu0 %v592
        %v605 = vpop.f32.mrf.mxu0
        %v606 = vadd.f32 %v362, %v605
        %v607 = vpop.f32.mrf.mxu0
        %608 = vdwg.mxu0
        %609 = vmatpush.bf16.msra.mxu0 %v450
        %610 = vmatpush.bf16.msra.mxu0 %v449
        %611 = vmatpush.bf16.msra.mxu0 %v448
        %612 = vmatpush.bf16.msra.mxu0 %v447
        %613 = vmatpush.bf16.msra.mxu0 %v446
        %614 = vmatpush.bf16.msra.mxu0 %v445
        %615 = vmatpush.bf16.msra.mxu0 %v444
        %616 = vmatpush.bf16.msra.mxu0 %v443
        %617 = vmatmul.bf16.gmra.mxu0 %v593
        %v618 = vpop.f32.mrf.mxu0
        %v619 = vadd.f32 %v606, %v618
        %v620 = vpop.f32.mrf.mxu0
        %621 = vdwg.mxu0
        %v622 = vmax.f32 %v619, 0.0
        %s623 = scalar_lea.vmem %s305, 32
        %v624 = vld [vmem:[%s623] sm:$0xff]
        %v626 = vunpack.c.l.b16 %v624
        %v627 = vunpack.c.h.b16 %v624
        %v628 = vpack.c.b16 %v626, %v626
        %v629 = vpack.c.b16 %v627, %v627
        %632 = vmatpush.bf16.msra.mxu0 %v442
        %633 = vmatpush.bf16.msra.mxu0 %v441
        %634 = vmatpush.bf16.msra.mxu0 %v440
        %635 = vmatpush.bf16.msra.mxu0 %v439
        %636 = vmatpush.bf16.msra.mxu0 %v438
        %637 = vmatpush.bf16.msra.mxu0 %v437
        %638 = vmatpush.bf16.msra.mxu0 %v436
        %639 = vmatpush.bf16.msra.mxu0 %v435
        %640 = vmatmul.bf16.gmra.mxu0 %v628
        %v641 = vpop.f32.mrf.mxu0
        %v642 = vadd.f32 %v362, %v641
        %v643 = vpop.f32.mrf.mxu0
        %644 = vdwg.mxu0
        %645 = vmatpush.bf16.msra.mxu0 %v450
        %646 = vmatpush.bf16.msra.mxu0 %v449
        %647 = vmatpush.bf16.msra.mxu0 %v448
        %648 = vmatpush.bf16.msra.mxu0 %v447
        %649 = vmatpush.bf16.msra.mxu0 %v446
        %650 = vmatpush.bf16.msra.mxu0 %v445
        %651 = vmatpush.bf16.msra.mxu0 %v444
        %652 = vmatpush.bf16.msra.mxu0 %v443
        %653 = vmatmul.bf16.gmra.mxu0 %v629
        %v654 = vpop.f32.mrf.mxu0
        %v655 = vadd.f32 %v642, %v654
        %v656 = vpop.f32.mrf.mxu0
        %657 = vdwg.mxu0
        %v658 = vmax.f32 %v655, 0.0
        %v659 = vmax.f32 %v622, %v658
        %s660 = scalar_lea.vmem %s305, 40
        %v661 = vld [vmem:[%s660] sm:$0xff]
        %v663 = vunpack.c.l.b16 %v661
        %v664 = vunpack.c.h.b16 %v661
        %v665 = vpack.c.b16 %v663, %v663
        %v666 = vpack.c.b16 %v664, %v664
        %669 = vmatpush.bf16.msra.mxu0 %v442
        %670 = vmatpush.bf16.msra.mxu0 %v441
        %671 = vmatpush.bf16.msra.mxu0 %v440
        %672 = vmatpush.bf16.msra.mxu0 %v439
        %673 = vmatpush.bf16.msra.mxu0 %v438
        %674 = vmatpush.bf16.msra.mxu0 %v437
        %675 = vmatpush.bf16.msra.mxu0 %v436
        %676 = vmatpush.bf16.msra.mxu0 %v435
        %677 = vmatmul.bf16.gmra.mxu0 %v665
        %v678 = vpop.f32.mrf.mxu0
        %v679 = vadd.f32 %v362, %v678
        %v680 = vpop.f32.mrf.mxu0
        %681 = vdwg.mxu0
        %682 = vmatpush.bf16.msra.mxu0 %v450
        %683 = vmatpush.bf16.msra.mxu0 %v449
        %684 = vmatpush.bf16.msra.mxu0 %v448
        %685 = vmatpush.bf16.msra.mxu0 %v447
        %686 = vmatpush.bf16.msra.mxu0 %v446
        %687 = vmatpush.bf16.msra.mxu0 %v445
        %688 = vmatpush.bf16.msra.mxu0 %v444
        %689 = vmatpush.bf16.msra.mxu0 %v443
        %690 = vmatmul.bf16.gmra.mxu0 %v666
        %v691 = vpop.f32.mrf.mxu0
        %v692 = vadd.f32 %v679, %v691
        %v693 = vpop.f32.mrf.mxu0
        %694 = vdwg.mxu0
        %v695 = vmax.f32 %v692, 0.0
        %v696 = vmax.f32 %v659, %v695
        %v698 = vrot.slane %v696, 7
        %v700 = vsel %vm571, %v696, %v698
        %v701 = vrot.slane %v696, 1
        %v703 = vsel %vm575, %v701, %v696
        %v704 = vmax.f32 %v700, %v696
        %v705 = vmax.f32 %v704, %v703
        %v706 = vsel %vm359, %v705, 0.0
        %v707 = vrot.slane %v706, 4
        %v708 = vadd.f32 %v706, %v707
        %v709 = vrot.slane %v708, 2
        %v710 = vadd.f32 %v708, %v709
        %v711 = vrot.slane %v710, 1
        %v712 = vadd.f32 %v710, %v711
        %v713 = vadd.f32 %v586, %v712
        %v714 = vld [vmem:[#allocation2] sm:$0x1]
        %v715 = vadd.f32 %v714, %v713
        %716 = vst [vmem:[#allocation2] sm:$0x1] %v715
        %p717 = scmp.eq.s32.totalorder %s26, 1
        // Predicated region
        $region53: #{backbone_forward.1} parent=47 // pred_check
          %p718 = pneg %p717
        $region54: #{backbone_forward.1} parent=47 // pred_check_branch
          %720 = sbr.rel (%p718) target = $region56
        $region55: #{backbone_forward.1} parent=47 // pred_region
          %v721 = vld [vmem:[#allocation2] sm:$0x1]
          %v722 = vmul.f32 %v721, 0.0625
          %v723 = vld [vmem:[%s3] sm:$0xff]
          %v724 = vld [vmem:[%s3 + $0x8] sm:$0xff]
          %v725 = vld [vmem:[%s3 + $0x10] sm:$0xff]
          %v726 = vld [vmem:[%s3 + $0x18] sm:$0xff]
          %v727 = vld [vmem:[%s3 + $0x20] sm:$0xff]
          %v728 = vld [vmem:[%s3 + $0x28] sm:$0xff]
          %v729 = vld [vmem:[%s3 + $0x30] sm:$0xff]
          %v730 = vld [vmem:[%s3 + $0x38] sm:$0xff]
          %v731 = vld [vmem:[%s3 + $0x40] sm:$0xff]
          %v732 = vld [vmem:[%s3 + $0x48] sm:$0xff]
          %v733 = vld [vmem:[%s3 + $0x50] sm:$0xff]
          %v734 = vld [vmem:[%s3 + $0x58] sm:$0xff]
          %v735 = vld [vmem:[%s3 + $0x60] sm:$0xff]
          %v736 = vld [vmem:[%s3 + $0x68] sm:$0xff]
          %v737 = vld [vmem:[%s3 + $0x70] sm:$0xff]
          %v738 = vld [vmem:[%s3 + $0x78] sm:$0xff]
          %v739 = vld [vmem:[%s4] sm:$0x1]
          %740 = vmatpush.msra.mxu0 %v738
          %741 = vmatpush.msra.mxu0 %v737
          %742 = vmatpush.msra.mxu0 %v736
          %743 = vmatpush.msra.mxu0 %v735
          %744 = vmatpush.msra.mxu0 %v734
          %745 = vmatpush.msra.mxu0 %v733
          %746 = vmatpush.msra.mxu0 %v732
          %747 = vmatpush.msra.mxu0 %v731
          %748 = vmatpush.msra.mxu0 %v730
          %749 = vmatpush.msra.mxu0 %v729
          %750 = vmatpush.msra.mxu0 %v728
          %751 = vmatpush.msra.mxu0 %v727
          %752 = vmatpush.msra.mxu0 %v726
          %753 = vmatpush.msra.mxu0 %v725
          %754 = vmatpush.msra.mxu0 %v724
          %755 = vmatpush.msra.mxu0 %v723
          %756 = vmatmul.f32.gmra.mxu0 %v722
          %v757 = vpop.f32.mrf.mxu0
          %v758 = vadd.f32 %v739, %v757
          %759 = vdwg.mxu0
          %v760 = vmax.f32 %v758, 0.0
          %v761 = vld [vmem:[%s5] sm:$0xff]
          %v762 = vld [vmem:[%s5 + $0x8] sm:$0xff]
          %v763 = vld [vmem:[%s5 + $0x10] sm:$0xff]
          %v764 = vld [vmem:[%s5 + $0x18] sm:$0xff]
          %v765 = vld [vmem:[%s5 + $0x20] sm:$0xff]
          %v766 = vld [vmem:[%s5 + $0x28] sm:$0xff]
          %v767 = vld [vmem:[%s5 + $0x30] sm:$0xff]
          %v768 = vld [vmem:[%s5 + $0x38] sm:$0xff]
          %v769 = vld [vmem:[%s5 + $0x40] sm:$0xff]
          %v770 = vld [vmem:[%s5 + $0x48] sm:$0xff]
          %v771 = vld [vmem:[%s5 + $0x50] sm:$0xff]
          %v772 = vld [vmem:[%s5 + $0x58] sm:$0xff]
          %v773 = vld [vmem:[%s5 + $0x60] sm:$0xff]
          %v774 = vld [vmem:[%s5 + $0x68] sm:$0xff]
          %v775 = vld [vmem:[%s5 + $0x70] sm:$0xff]
          %v776 = vld [vmem:[%s5 + $0x78] sm:$0xff]
          %v777 = vld [vmem:[%s6] sm:$0x1]
          %778 = vmatpush.msra.mxu0 %v776
          %779 = vmatpush.msra.mxu0 %v775
          %780 = vmatpush.msra.mxu0 %v774
          %781 = vmatpush.msra.mxu0 %v773
          %782 = vmatpush.msra.mxu0 %v772
          %783 = vmatpush.msra.mxu0 %v771
          %784 = vmatpush.msra.mxu0 %v770
          %785 = vmatpush.msra.mxu0 %v769
          %786 = vmatpush.msra.mxu0 %v768
          %787 = vmatpush.msra.mxu0 %v767
          %788 = vmatpush.msra.mxu0 %v766
          %789 = vmatpush.msra.mxu0 %v765
          %790 = vmatpush.msra.mxu0 %v764
          %791 = vmatpush.msra.mxu0 %v763
          %792 = vmatpush.msra.mxu0 %v762
          %793 = vmatpush.msra.mxu0 %v761
          %794 = vmatmul.f32.gmra.mxu0 %v760
          %v795 = vpop.f32.mrf.mxu0
          %v796 = vadd.f32 %v777, %v795
          %797 = vdwg.mxu0
          %798 = vst [vmem:[%s295] sm:$0x1] %v796
        $region56: #{backbone_forward.1} parent=47 // pred_fallthru
          _
        %s799 = sand.u32 %s195, 1
        %s800 = scalar_lea.sflag [#allocation4], %s799
        %s801 = sand.u32 %s195, 1
        %s802 = scalar_lea.vmem [#allocation3], %s801
        // Predicated region
        $region57: #{backbone_forward.1} parent=47 // pred_check
          %p803 = pneg %p205
        $region58: #{backbone_forward.1} parent=47 // pred_check_branch
          %805 = sbr.rel (%p803) target = $region60
        $region59: #{backbone_forward.1} parent=47 // pred_region
          %807 = vsyncadd %s800, 0
          %s808 = scalar_lea.hbm %s7, %s25
          %s810 = sshll.u32 %s802, 4
          %s811 = int_to_ptr.vmem [resolvable:$true] %s810
          %s812 = sshll.u32 %s808, 4
          %s813 = int_to_ptr.hbm [resolvable:$true] %s812
          %815 = dma.vmem_to_hbm [thread:$0]  %s811, 16, %s813, %s800
        $region60: #{backbone_forward.1} parent=47 // pred_fallthru
          _
      $region48: #{backbone_forward.1} parent=5 // pred_fallthru
        _
      %p816 = scmp.le.s32.totalorder 2, %s16
      // Predicated region
      $region61: #{backbone_forward.1} parent=5 // pred_check
        %p817 = pneg %p816
      $region62: #{backbone_forward.1} parent=5 // pred_check_branch
        %819 = sbr.rel (%p817) target = $region64
      $region63: #{backbone_forward.1} parent=5 // pred_region
        %s820 = ssub.s32 %s16, 2
        // Predicated region
        $region65: #{backbone_forward.1} parent=63 // pred_check
          %p821 = pneg %p211
        $region66: #{backbone_forward.1} parent=63 // pred_check_branch
          %823 = sbr.rel (%p821) target = $region68
        $region67: #{backbone_forward.1} parent=63 // pred_region
          %s824 = sand.u32 %s196, 1
          %s825 = scalar_lea.sflag [#allocation4], %s824
          %s826 = sand.u32 %s196, 1
          %s827 = scalar_lea.vmem [#allocation3], %s826
          %829 = dma.done %s825, 16
        $region68: #{backbone_forward.1} parent=63 // pred_fallthru
          _
      $region64: #{backbone_forward.1} parent=5 // pred_fallthru
        _
    $region6: #{backbone_forward.1} parent=1 // loop_footer
      %s20 = sadd.s32 1, %s16
    $region7: #{backbone_forward.1} parent=1 // loop_footer_branch
      %15 = sbr.rel target = $region3
    $region8: #{backbone_forward.1} parent=1 // loop_exit
      _
    %830 = vsyncpa [#allocation4], 1
    %s831 = scalar_lea.sflag [#allocation4], 1
    %832 = vsyncpa %s831, 1

</llo_original>
